<compile_context>
chip_gen: v7x
topology: tpu7x:2x2x1
jax: 0.10.0
libtpu: 0.0.40
codegen_flags: <defaults>
</compile_context>

<pallas_src>
import jax
import jax.numpy as jnp
from jax.experimental import pallas as pl
from jax.experimental.pallas import tpu as pltpu


def _layernorm2d_kernel(eps, use_mxu_stats):
    def kernel(x_ref, w_ref, b_ref, o_ref):
        # x_ref / o_ref: (C, THW); w_ref / b_ref: (C, 1)
        x_in = x_ref[...]
        x = x_in.astype(jnp.float32)
        w = w_ref[...].astype(jnp.float32)                 # (C, 1)
        b = b_ref[...].astype(jnp.float32)                 # (C, 1)
        C = x.shape[0]
        inv_c = jnp.float32(1.0 / C)

        if use_mxu_stats:
            # bf16: channel sums on the (otherwise idle) MXU, f32 accumulate.
            ones = jnp.ones((1, C), dtype=x_in.dtype)
            u = jnp.dot(ones, x_in, preferred_element_type=jnp.float32) * inv_c
            uu = jnp.dot(ones, x_in * x_in,
                         preferred_element_type=jnp.float32) * inv_c
        else:
            # f32: VPU sublane reduction, single multiply by 1/C (no divides).
            u = jnp.sum(x, axis=0, keepdims=True) * inv_c      # (1, THW)
            uu = jnp.sum(x * x, axis=0, keepdims=True) * inv_c  # (1, THW)

        var = jnp.maximum(uu - u * u, 0.0)                  # biased var, >= 0
        r = jax.lax.rsqrt(var + eps)                        # (1, THW), EUP

        # Fused epilogue: no materialized (C, THW) "scale" temporary.
        o_ref[...] = (((x - u) * r) * w + b).astype(o_ref.dtype)

    return kernel


def _plan(C, HW, itemsize, N):
    """Generation-aware spatial tile width and scoped-VMEM limit."""
    try:
        kind = jax.devices()[0].device_kind.lower()
    except Exception:
        kind = ""
    if "v7" in kind:
        # 64 MiB VMEM, ~3.2 TB/s HBM, 2 TensorCores -> keep >= ~16 grid steps.
        target_bytes, vmem_limit, min_steps = 3 << 20, 48 << 20, 16
    elif "v6" in kind:
        # 128 MiB VMEM, ~1.4 TB/s HBM: bigger tiles amortize the 0.35 us step.
        target_bytes, vmem_limit, min_steps = 8 << 20, 96 << 20, 4
    elif ("v5" in kind and "lite" in kind) or "v5e" in kind:
        # v5e: 128 MiB physical but 16 MiB scoped default -> raise the limit.
        target_bytes, vmem_limit, min_steps = 3 << 20, 64 << 20, 4
    elif "v5" in kind or "v4" in kind:
        target_bytes, vmem_limit, min_steps = 4 << 20, 64 << 20, 4
    else:
        # Unknown generation: stay inside the default scoped VMEM limit.
        target_bytes, vmem_limit, min_steps = 2 << 20, None, 4

    if HW <= 128:
        return HW, vmem_limit                       # single full-extent block

    max_thw = max(128, (target_bytes // max(C * itemsize, 1)) // 128 * 128)
    # Wide-C inputs: don't collapse to 128-wide tiles (per-step-overhead
    # cliff) as long as ~6 live block copies still fit the VMEM budget.
    budget = vmem_limit if vmem_limit is not None else (16 << 20)
    if max_thw < 512 and 6 * C * 512 * itemsize <= budget:
        max_thw = 512

    if max_thw >= HW:
        return HW, vmem_limit                       # one tile, zero padding

    thw = max_thw
    # Keep enough grid steps for pipelining / both TensorCores (v7x).
    while thw > 512 and N * pl.cdiv(HW, thw) < min_steps:
        thw = max(512, ((thw // 2) // 128) * 128)
    return thw, vmem_limit


def layernorm2d(x, weight, bias, eps=1e-6, block_hw=None):
    """x: (N, C, H, W) NCHW; weight, bias: (C,). Returns (N, C, H, W)."""
    N, C, H, W = x.shape
    HW = H * W
    x2 = x.reshape(N, C, HW)
    w2 = weight.reshape(C, 1)
    b2 = bias.reshape(C, 1)

    thw, vmem_limit = _plan(C, HW, jnp.dtype(x.dtype).itemsize, N)
    if block_hw is not None:
        thw = block_hw                              # testing / manual override
    n_hw_tiles = pl.cdiv(HW, thw)                   # ragged last tile is OK

    use_mxu_stats = x.dtype == jnp.bfloat16

    cp_kwargs = dict(dimension_semantics=("parallel", "parallel"))
    if vmem_limit is not None:
        cp_kwargs["vmem_limit_bytes"] = vmem_limit

    out = pl.pallas_call(
        _layernorm2d_kernel(eps, use_mxu_stats),
        out_shape=jax.ShapeDtypeStruct((N, C, HW), x.dtype),
        grid_spec=pltpu.PrefetchScalarGridSpec(
            num_scalar_prefetch=0,
            grid=(N, n_hw_tiles),
            in_specs=[
                pl.BlockSpec((pl.Squeezed(), C, thw), lambda n, j: (n, 0, j)),
                pl.BlockSpec((C, 1), lambda n, j: (0, 0)),
                pl.BlockSpec((C, 1), lambda n, j: (0, 0)),
            ],
            out_specs=pl.BlockSpec((pl.Squeezed(), C, thw),
                                   lambda n, j: (n, 0, j)),
        ),
        compiler_params=pltpu.CompilerParams(**cp_kwargs),
    )(x2, w2, b2)

    return out.reshape(N, C, H, W)


def layernorm2d_ref(x, weight, bias, eps=1e-6):
    u = jnp.mean(x, axis=1, keepdims=True)
    s = jnp.mean((x - u) ** 2, axis=1, keepdims=True)
    y = (x - u) / jnp.sqrt(s + eps)
    return weight[None, :, None, None] * y + bias[None, :, None, None]


if __name__ == "__main__":
    key = jax.random.PRNGKey(0)
    kx, kw, kb, kx2, kx3 = jax.random.split(key, 5)

    # Case 1: small, HW a multiple of 128 (single full-extent tile).
    N, C, H, W = 2, 4, 16, 16
    x = jax.random.normal(kx, (N, C, H, W), dtype=jnp.float32)
    weight = 1.0 + 0.1 * jax.random.normal(kw, (C,), dtype=jnp.float32)
    bias = 0.1 * jax.random.normal(kb, (C,), dtype=jnp.float32)
    out = jax.block_until_ready(layernorm2d(x, weight, bias))
    ref = layernorm2d_ref(x, weight, bias)
    assert out.shape == (N, C, H, W)
    assert jnp.allclose(out, ref, atol=1e-5, rtol=1e-5)

    # Case 2: ragged HW (20*20 = 400), single full-extent tile -> no pad/slice.
    N2, C2, H2, W2 = 1, 8, 20, 20
    x_b = jax.random.normal(kx2, (N2, C2, H2, W2), dtype=jnp.float32)
    w_b = 1.0 + 0.1 * jax.random.normal(kw, (C2,), dtype=jnp.float32)
    b_b = 0.1 * jax.random.normal(kb, (C2,), dtype=jnp.float32)
    out_b = jax.block_until_ready(layernorm2d(x_b, w_b, b_b))
    ref_b = layernorm2d_ref(x_b, w_b, b_b)
    assert out_b.shape == (N2, C2, H2, W2)
    assert jnp.allclose(out_b, ref_b, atol=1e-5, rtol=1e-5)

    # Case 3: force multi-tile spatial grid with a ragged last block
    # (exercises masked writeback on the partial tile).
    out_c = jax.block_until_ready(layernorm2d(x_b, w_b, b_b, block_hw=128))
    assert jnp.allclose(out_c, ref_b, atol=1e-5, rtol=1e-5)

    # Case 4: bf16 input exercises the MXU-based channel reduction.
    x_d = jax.random.normal(kx3, (2, 8, 16, 16), dtype=jnp.bfloat16)
    out_d = jax.block_until_ready(layernorm2d(x_d, w_b, b_b))
    ref_d = layernorm2d_ref(x_d.astype(jnp.float32), w_b, b_b)
    assert jnp.allclose(out_d.astype(jnp.float32), ref_d, atol=1e-1, rtol=1e-1)

    print("KERNEL_OK")
</pallas_src>

<mosaic_0001>
module attributes {stable_mosaic.version = 11 : i64} {
  func.func @kernel(%arg0: i32, %arg1: i32, %arg2: memref<1x4x256xf32, #tpu.memory_space<vmem>>, %arg3: memref<4x1xf32, #tpu.memory_space<vmem>>, %arg4: memref<4x1xf32, #tpu.memory_space<vmem>>, %arg5: memref<1x4x256xf32, #tpu.memory_space<vmem>>) attributes {dimension_semantics = [#tpu.dimension_semantics<parallel>, #tpu.dimension_semantics<parallel>], iteration_bounds = array<i64: 2, 1>, scalar_prefetch = 0 : i64, scratch_operands = 0 : i64, tpu.core_type = #tpu.core_type<tc>, window_params = [{transform_indices = @transform_0, window_bounds = array<i64: 1, 4, 256>}, {pipeline_mode = #tpu.pipeline_mode<synchronous>, transform_indices = @transform_1, window_bounds = array<i64: 4, 1>}, {pipeline_mode = #tpu.pipeline_mode<synchronous>, transform_indices = @transform_2, window_bounds = array<i64: 4, 1>}, {transform_indices = @transform_3, window_bounds = array<i64: 1, 4, 256>}]} {
    %c0 = arith.constant 0 : index
    %c0_0 = arith.constant 0 : index
    %c0_1 = arith.constant 0 : index
    %0 = vector.load %arg2[%c0, %c0_0, %c0_1] : memref<1x4x256xf32, #tpu.memory_space<vmem>>, vector<1x4x256xf32>
    %1 = vector.shape_cast %0 : vector<1x4x256xf32> to vector<4x256xf32>
    %c0_2 = arith.constant 0 : index
    %c0_3 = arith.constant 0 : index
    %2 = vector.load %arg3[%c0_2, %c0_3] : memref<4x1xf32, #tpu.memory_space<vmem>>, vector<4x1xf32>
    %c0_4 = arith.constant 0 : index
    %c0_5 = arith.constant 0 : index
    %3 = vector.load %arg4[%c0_4, %c0_5] : memref<4x1xf32, #tpu.memory_space<vmem>>, vector<4x1xf32>
    %cst = arith.constant dense<0.000000e+00> : vector<256xf32>
    %4 = vector.multi_reduction <add>, %1, %cst [0] : vector<4x256xf32> to vector<256xf32>
    %5 = vector.shape_cast %4 : vector<256xf32> to vector<1x256xf32>
    %cst_6 = arith.constant 2.500000e-01 : f32
    %6 = vector.broadcast %cst_6 : f32 to vector<1x256xf32>
    %7 = arith.mulf %5, %6 : vector<1x256xf32>
    %8 = arith.mulf %1, %1 : vector<4x256xf32>
    %cst_7 = arith.constant dense<0.000000e+00> : vector<256xf32>
    %9 = vector.multi_reduction <add>, %8, %cst_7 [0] : vector<4x256xf32> to vector<256xf32>
    %10 = vector.shape_cast %9 : vector<256xf32> to vector<1x256xf32>
    %cst_8 = arith.constant 2.500000e-01 : f32
    %11 = vector.broadcast %cst_8 : f32 to vector<1x256xf32>
    %12 = arith.mulf %10, %11 : vector<1x256xf32>
    %13 = arith.mulf %7, %7 : vector<1x256xf32>
    %14 = arith.subf %12, %13 : vector<1x256xf32>
    %cst_9 = arith.constant 0.000000e+00 : f32
    %15 = vector.broadcast %cst_9 : f32 to vector<1x256xf32>
    %16 = arith.maximumf %14, %15 : vector<1x256xf32>
    %cst_10 = arith.constant 9.99999997E-7 : f32
    %17 = vector.broadcast %cst_10 : f32 to vector<1x256xf32>
    %18 = arith.addf %16, %17 : vector<1x256xf32>
    %19 = math.rsqrt %18 : vector<1x256xf32>
    %20 = vector.broadcast %7 : vector<1x256xf32> to vector<4x256xf32>
    %21 = arith.subf %1, %20 : vector<4x256xf32>
    %22 = vector.broadcast %19 : vector<1x256xf32> to vector<4x256xf32>
    %23 = arith.mulf %21, %22 : vector<4x256xf32>
    %24 = vector.broadcast %2 : vector<4x1xf32> to vector<4x256xf32>
    %25 = arith.mulf %23, %24 : vector<4x256xf32>
    %26 = vector.broadcast %3 : vector<4x1xf32> to vector<4x256xf32>
    %27 = arith.addf %25, %26 : vector<4x256xf32>
    %c0_11 = arith.constant 0 : index
    %c0_12 = arith.constant 0 : index
    %c0_13 = arith.constant 0 : index
    %28 = vector.load %arg5[%c0_11, %c0_12, %c0_13] : memref<1x4x256xf32, #tpu.memory_space<vmem>>, vector<1x4x256xf32>
    %29 = vector.shape_cast %28 : vector<1x4x256xf32> to vector<4x256xf32>
    %30 = vector.shape_cast %27 : vector<4x256xf32> to vector<1x4x256xf32>
    tpu.vector_store %arg5[%c0_11, %c0_12, %c0_13], %30 {strides = array<i32>} : memref<1x4x256xf32, #tpu.memory_space<vmem>>, vector<1x4x256xf32>,
    return
  }
  func.func @transform_0(%arg0: i32, %arg1: i32) -> (i32, i32, i32) {
    %c0_i32 = arith.constant 0 : i32
    %c0_i32_0 = arith.constant 0 : i32
    return %arg0, %c0_i32, %arg1 : i32, i32, i32
  }
  func.func @transform_1(%arg0: i32, %arg1: i32) -> (i32, i32) {
    %c0_i32 = arith.constant 0 : i32
    %c0_i32_0 = arith.constant 0 : i32
    %c0_i32_1 = arith.constant 0 : i32
    return %c0_i32, %c0_i32_0 : i32, i32
  }
  func.func @transform_2(%arg0: i32, %arg1: i32) -> (i32, i32) {
    %c0_i32 = arith.constant 0 : i32
    %c0_i32_0 = arith.constant 0 : i32
    %c0_i32_1 = arith.constant 0 : i32
    return %c0_i32, %c0_i32_0 : i32, i32
  }
  func.func @transform_3(%arg0: i32, %arg1: i32) -> (i32, i32, i32) {
    %c0_i32 = arith.constant 0 : i32
    %c0_i32_0 = arith.constant 0 : i32
    return %arg0, %c0_i32, %arg1 : i32, i32, i32
  }
}

</mosaic_0001>

<llo_original>
// kernel: tpu_custom_call.1
$region0: #{tpu_custom_call.1}
  #allocation0 [shape = 'u32[]', space=smem, size = 0x4, offset = 0x4, fixed_abs, tag = 'smem constant byte address 0x4 - core index']
  #allocation1 [shape = 'u32[144,128]{1,0:T(1,128)}', space=vmem, size = 0x12000, scoped, tag = 'internal scratch']
  %s0 = inlined_call_operand.hbm [shape: f32[2,4,256], index: 0, kind: input, shape index: {}]
  %s1 = inlined_call_operand.vmem [shape: f32[4,1], index: 1, kind: input, shape index: {}]
  %s2 = inlined_call_operand.vmem [shape: f32[4,1], index: 2, kind: input, shape index: {}]
  %s3 = inlined_call_operand.hbm [shape: f32[2,4,256], index: 3, kind: output, shape index: {}]
  %s4 = sld [smem:[#allocation0]]
  $region49: #{tpu_custom_call.1} parent=0
    _
  %s6 = ssub.s32 1, %s4
  %s7 = scalar_select 0, %s6, %s4
  $region1: #{tpu_custom_call.1} parent=0
    #allocation2 [shape = 'u8[8192]{0}', space=vmem, size = 0x2000, scoped, tag = 'input window, operand 0']
    #allocation3 [shape = 's32[2]{0}', space=sflag, size = 0x8, scoped, tag = 'scoped memory for tpu_custom_call.1']
    #allocation4 [shape = 's32[2]{0}', space=sflag, size = 0x8, scoped, tag = 'scoped memory for tpu_custom_call.1']
    #allocation5 [shape = 'u8[8192]{0}', space=vmem, size = 0x2000, scoped, tag = 'output window, operand 0']
    %8 = vsyncpa [#allocation3], 0
    %s9 = scalar_lea.sflag [#allocation3], 1
    %10 = vsyncpa %s9, 0
    %11 = vsyncpa [#allocation4], 0
    %s12 = scalar_lea.sflag [#allocation4], 1
    %13 = vsyncpa %s12, 0
    loop: start=0, step=1, limit=4
    $region2: #{tpu_custom_call.1} parent=1 // loop_pre_header
      _
    $region3: #{tpu_custom_call.1} parent=1 // loop_header
      %s15 = sphi 0, %s19
      %p16 = scmp.ge.s32.totalorder %s15, 4
      %s22 = sphi 0, %s34
      %s23 = sphi 0, %s30
      %s24 = sphi 0, %s22
      %s25 = sphi 0, %s23
      %s26 = sphi 0, %s24
      %s27 = sphi 0, %s25
      %s39 = sphi 0, %s41
      %s42 = sphi 0, %s39
      %s43 = sphi 0, %s42
      %s59 = sphi 0, %s43
      %s63 = sphi 0, %s63
      %s65 = sphi 0, %s63
      %s66 = sphi 0, %s65
      %s80 = sphi 0, %s66
      %s84 = sphi 0, %s84
      %s86 = sphi 0, %s84
      %s87 = sphi 0, %s86
      %s101 = sphi 0, %s87
      %s109 = sphi 0, %s111
      %s112 = sphi 0, %s109
      %s113 = sphi 0, %s112
      %s129 = sphi 0, %s113
    $region4: #{tpu_custom_call.1} parent=1 // loop_header_branch
      %18 = sbr.rel (%p16) target = $region8
    $region5: #{tpu_custom_call.1} parent=1 // loop_body
      %s20 = ssub.s32 %s15, 1
      %s21 = ssub.s32 %s15, 2
      %s28 = sadd.s32 1, %s23
      %p29 = scmp.ge.s32.totalorder %s28, 1
      %s30 = scalar_select %p29, 0, %s28
      %s31 = sadd.s32 1, %s22
      %s32 = scalar_select %p29, %s31, %s22
      %p33 = scmp.ge.s32.totalorder %s32, 2
      %s34 = scalar_select %p33, 0, %s32
      %s35 = ssub.s32 %s22, %s34
      %s36 = ssub.s32 %s23, %s30
      %s37 = sor.u32 %s35, %s36
      %p38 = scmp.eq.s32.totalorder %s37, 0
      %s40 = sadd.s32 %s39, 1
      %s41 = scalar_select %p38, %s39, %s40
      %p44 = pneg %p38
      %p45 = scmp.eq.s32.totalorder %s15, 1
      %p46 = por %p44, %p45
      %p47 = scmp.ne.s32.totalorder %s39, %s42
      %p48 = scmp.eq.s32.totalorder %s15, 0
      %p49 = por %p47, %p48
      %p50 = scmp.ne.s32.totalorder %s39, %s42
      %p51 = scmp.eq.s32.totalorder %s20, 1
      %p52 = por %p50, %p51
      %p53 = scmp.ne.s32.totalorder %s42, %s43
      %p54 = scmp.eq.s32.totalorder %s20, 0
      %p55 = por %p53, %p54
      %p56 = scmp.ne.s32.totalorder %s42, %s43
      %p57 = scmp.eq.s32.totalorder %s21, 1
      %p58 = por %p56, %p57
      %p60 = scmp.ne.s32.totalorder %s43, %s59
      %p61 = scmp.eq.s32.totalorder %s21, 0
      %p62 = por %p60, %p61
      %s64 = sadd.s32 %s63, 1
      %p67 = scmp.eq.s32.totalorder %s15, 1
      %p68 = scmp.ne.s32.totalorder %s63, %s65
      %p69 = scmp.eq.s32.totalorder %s15, 0
      %p70 = por %p68, %p69
      %p71 = scmp.ne.s32.totalorder %s63, %s65
      %p72 = scmp.eq.s32.totalorder %s20, 1
      %p73 = por %p71, %p72
      %p74 = scmp.ne.s32.totalorder %s65, %s66
      %p75 = scmp.eq.s32.totalorder %s20, 0
      %p76 = por %p74, %p75
      %p77 = scmp.ne.s32.totalorder %s65, %s66
      %p78 = scmp.eq.s32.totalorder %s21, 1
      %p79 = por %p77, %p78
      %p81 = scmp.ne.s32.totalorder %s66, %s80
      %p82 = scmp.eq.s32.totalorder %s21, 0
      %p83 = por %p81, %p82
      %s85 = sadd.s32 %s84, 1
      %p88 = scmp.eq.s32.totalorder %s15, 1
      %p89 = scmp.ne.s32.totalorder %s84, %s86
      %p90 = scmp.eq.s32.totalorder %s15, 0
      %p91 = por %p89, %p90
      %p92 = scmp.ne.s32.totalorder %s84, %s86
      %p93 = scmp.eq.s32.totalorder %s20, 1
      %p94 = por %p92, %p93
      %p95 = scmp.ne.s32.totalorder %s86, %s87
      %p96 = scmp.eq.s32.totalorder %s20, 0
      %p97 = por %p95, %p96
      %p98 = scmp.ne.s32.totalorder %s86, %s87
      %p99 = scmp.eq.s32.totalorder %s21, 1
      %p100 = por %p98, %p99
      %p102 = scmp.ne.s32.totalorder %s87, %s101
      %p103 = scmp.eq.s32.totalorder %s21, 0
      %p104 = por %p102, %p103
      %s105 = ssub.s32 %s22, %s34
      %s106 = ssub.s32 %s23, %s30
      %s107 = sor.u32 %s105, %s106
      %p108 = scmp.eq.s32.totalorder %s107, 0
      %s110 = sadd.s32 %s109, 1
      %s111 = scalar_select %p108, %s109, %s110
      %p114 = pneg %p108
      %p115 = scmp.eq.s32.totalorder %s15, 1
      %p116 = por %p114, %p115
      %p117 = scmp.ne.s32.totalorder %s109, %s112
      %p118 = scmp.eq.s32.totalorder %s15, 0
      %p119 = por %p117, %p118
      %p120 = scmp.ne.s32.totalorder %s109, %s112
      %p121 = scmp.eq.s32.totalorder %s20, 1
      %p122 = por %p120, %p121
      %p123 = scmp.ne.s32.totalorder %s112, %s113
      %p124 = scmp.eq.s32.totalorder %s20, 0
      %p125 = por %p123, %p124
      %p126 = scmp.ne.s32.totalorder %s112, %s113
      %p127 = scmp.eq.s32.totalorder %s21, 1
      %p128 = por %p126, %p127
      %p130 = scmp.ne.s32.totalorder %s113, %s129
      %p131 = scmp.eq.s32.totalorder %s21, 0
      %p132 = por %p130, %p131
      %p133 = scmp.le.s32.totalorder 1, %s15
      %p134 = scmp.lt.s32.totalorder %s15, 3
      %p135 = pnand %p133, %p134
      %p136 = pneg %p135
      // Predicated region
      $region9: #{tpu_custom_call.1} parent=5 // pred_check
        _
      $region10: #{tpu_custom_call.1} parent=5 // pred_check_branch
        %138 = sbr.rel (%p135) target = $region12
      $region11: #{tpu_custom_call.1} parent=5 // pred_region
        %s139 = ssub.s32 %s15, 1
        // Predicated region
        $region13: #{tpu_custom_call.1} parent=11 // pred_check
          %p140 = pneg %p76
        $region14: #{tpu_custom_call.1} parent=11 // pred_check_branch
          %142 = sbr.rel (%p140) target = $region16
        $region15: #{tpu_custom_call.1} parent=11 // pred_region
          _
        $region16: #{tpu_custom_call.1} parent=11 // pred_fallthru
          _
        // Predicated region
        $region17: #{tpu_custom_call.1} parent=11 // pred_check
          %p143 = pneg %p97
        $region18: #{tpu_custom_call.1} parent=11 // pred_check_branch
          %145 = sbr.rel (%p143) target = $region20
        $region19: #{tpu_custom_call.1} parent=11 // pred_region
          _
        $region20: #{tpu_custom_call.1} parent=11 // pred_fallthru
          _
      $region12: #{tpu_custom_call.1} parent=5 // pred_fallthru
        _
      %p146 = scmp.lt.s32.totalorder %s15, 2
      // Predicated region
      $region21: #{tpu_custom_call.1} parent=5 // pred_check
        %p147 = pneg %p146
      $region22: #{tpu_custom_call.1} parent=5 // pred_check_branch
        %149 = sbr.rel (%p147) target = $region24
      $region23: #{tpu_custom_call.1} parent=5 // pred_region
        // Predicated region
        $region25: #{tpu_custom_call.1} parent=23 // pred_check
          %p150 = pneg %p49
        $region26: #{tpu_custom_call.1} parent=23 // pred_check_branch
          %152 = sbr.rel (%p150) target = $region28
        $region27: #{tpu_custom_call.1} parent=23 // pred_region
          %s153 = sand.u32 %s39, 1
          %s154 = scalar_lea.sflag [#allocation3], %s153
          %s155 = sand.u32 %s39, 1
          %s156 = smul.addr %s155, 8
          %s157 = scalar_lea.vmem [#allocation2], %s156
          %s158 = smul.u32 2, %s23
          %s160 = ssub.s32 128, 128
          %161 = vsyncadd %s154, %s160
          %s162 = smul.addr %s22, 2
          %s163 = sadd.s32 %s158, %s162
          %s164 = smul.addr %s163, 64
          %s165 = scalar_lea.hbm %s0, %s164
          %s167 = sshll.u32 %s157, 4
          %s168 = int_to_ptr.vmem [resolvable:$true] %s167
          %170 = dma.hbm_to_vmem [thread:$0]  %s165, 128, %s168, %s154
        $region28: #{tpu_custom_call.1} parent=23 // pred_fallthru
          _
      $region24: #{tpu_custom_call.1} parent=5 // pred_fallthru
        _
      %p171 = scmp.le.s32.totalorder 1, %s15
      %p172 = scmp.lt.s32.totalorder %s15, 3
      %p173 = pnand %p171, %p172
      %p174 = pneg %p173
      // Predicated region
      $region29: #{tpu_custom_call.1} parent=5 // pred_check
        _
      $region30: #{tpu_custom_call.1} parent=5 // pred_check_branch
        %176 = sbr.rel (%p173) target = $region32
      $region31: #{tpu_custom_call.1} parent=5 // pred_region
        %s177 = ssub.s32 %s15, 1
        %s178 = sand.u32 %s42, 1
        %s179 = scalar_lea.sflag [#allocation3], %s178
        %s180 = sand.u32 %s42, 1
        %s181 = smul.addr %s180, 8
        %s182 = scalar_lea.vmem [#allocation2], %s181
        // Predicated region
        $region33: #{tpu_custom_call.1} parent=31 // pred_check
          %p183 = pneg %p55
        $region34: #{tpu_custom_call.1} parent=31 // pred_check_branch
          %185 = sbr.rel (%p183) target = $region36
        $region35: #{tpu_custom_call.1} parent=31 // pred_region
          %186 = dma.done %s179, 128
        $region36: #{tpu_custom_call.1} parent=31 // pred_fallthru
          _
        %s187 = sand.u32 %s42, 1
        %s188 = scalar_lea.sflag [#allocation3], %s187
        %s189 = sand.u32 %s42, 1
        %s190 = smul.addr %s189, 8
        %s191 = scalar_lea.vmem [#allocation2], %s190
        %p192 = pneg %p55
        %p193 = pneg %p52
        %p194 = pneg %p76
        %p195 = pneg %p73
        %p196 = pneg %p97
        %p197 = pneg %p94
        %p198 = pneg %p125
        %p199 = pneg %p122
        %s200 = sand.u32 %s112, 1
        %s201 = scalar_lea.sflag [#allocation4], %s200
        %s202 = sand.u32 %s112, 1
        %s203 = smul.addr %s202, 8
        %s204 = scalar_lea.vmem [#allocation5], %s203
        %s205 = smul.u32 2, %s25
        %s206 = smul.u32 2, %s25
        %v207 = vld [vmem:[%s182] sm:$0xff]
        %v208 = vld [vmem:[%s1] sm:$0xf]
        %v209 = vld [vmem:[%s2] sm:$0xf]
        %v211 = vcombine.high %v207, %v207
        %vm213 = vcmask 1043456
        %v214 = vsel %vm213, %v207, 0.0
        %v215 = vrot.slane %v214, 4
        %v216 = vadd.f32 %v214, %v215
        %v217 = vrot.slane %v216, 2
        %v218 = vadd.f32 %v216, %v217
        %v219 = vrot.slane %v218, 1
        %v220 = vadd.f32 %v218, %v219
        %v221 = vsel %vm213, %v211, 0.0
        %v222 = vrot.slane %v221, 4
        %v223 = vadd.f32 %v221, %v222
        %v224 = vrot.slane %v223, 2
        %v225 = vadd.f32 %v223, %v224
        %v226 = vrot.slane %v225, 1
        %v227 = vadd.f32 %v225, %v226
        %v228 = vmul.f32 %v220, 0.25
        %v229 = vmul.f32 %v227, 0.25
        %v230 = vmul.f32 %v207, %v207
        %v232 = vcombine.high %v230, %v230
        %v234 = vsel %vm213, %v230, 0.0
        %v235 = vrot.slane %v234, 4
        %v236 = vadd.f32 %v234, %v235
        %v237 = vrot.slane %v236, 2
        %v238 = vadd.f32 %v236, %v237
        %v239 = vrot.slane %v238, 1
        %v240 = vadd.f32 %v238, %v239
        %v241 = vsel %vm213, %v232, 0.0
        %v242 = vrot.slane %v241, 4
        %v243 = vadd.f32 %v241, %v242
        %v244 = vrot.slane %v243, 2
        %v245 = vadd.f32 %v243, %v244
        %v246 = vrot.slane %v245, 1
        %v247 = vadd.f32 %v245, %v246
        %v248 = vmul.f32 %v240, 0.25
        %v249 = vmul.f32 %v247, 0.25
        %v250 = vmul.f32 %v228, %v228
        %v251 = vmul.f32 %v229, %v229
        %v252 = vsub.f32 %v248, %v250
        %v253 = vsub.f32 %v249, %v251
        %v254 = vmax.f32 %v252, 0.0
        %v255 = vmax.f32 %v253, 0.0
        %v256 = vadd.f32 %v254, 1e-06
        %v257 = vadd.f32 %v255, 1e-06
        %v258 = vrsqrt.pop %v256
        %v259 = vrsqrt.pop %v257
        %v262 = vcombine.low %v228, %v229
        %v264 = vsub.f32 %v207, %v262
        %v267 = vcombine.low %v258, %v259
        %v269 = vmul.f32 %v264, %v267
        %271 = vset.pattern.permute.xlu0 0
        %272 = vperm.xlu0 %271, %v208
        %v273 = vpop.permute.xlu0 %272
        %v275 = vunpack.c.l.s4 839922192
        %v276 = vunpack.c.0.s8 %v275
        %v277 = vlaneseq
        %v278 = vshrl.u32 %v277, 7
        %v279 = vsub.s32 %v276, %v278
        %v280 = vrot.slane %v273, %v279
        %v282 = vmul.f32 %v269, %v280
        %284 = vset.pattern.permute.xlu0 0
        %285 = vperm.xlu0 %284, %v209
        %v286 = vpop.permute.xlu0 %285
        %v288 = vunpack.c.l.s4 839922192
        %v289 = vunpack.c.0.s8 %v288
        %v290 = vlaneseq
        %v291 = vshrl.u32 %v290, 7
        %v292 = vsub.s32 %v289, %v291
        %v293 = vrot.slane %v286, %v292
        %v295 = vadd.f32 %v282, %v293
        %296 = vst [vmem:[%s204] sm:$0xff] %v295
        %s297 = sand.u32 %s112, 1
        %s298 = scalar_lea.sflag [#allocation4], %s297
        %s299 = sand.u32 %s112, 1
        %s300 = smul.addr %s299, 8
        %s301 = scalar_lea.vmem [#allocation5], %s300
        // Predicated region
        $region37: #{tpu_custom_call.1} parent=31 // pred_check
          %p302 = pneg %p122
        $region38: #{tpu_custom_call.1} parent=31 // pred_check_branch
          %304 = sbr.rel (%p302) target = $region40
        $region39: #{tpu_custom_call.1} parent=31 // pred_region
          %s305 = smul.u32 2, %s25
          %s307 = ssub.s32 128, 128
          %308 = vsyncadd %s298, %s307
          %s309 = smul.addr %s24, 2
          %s310 = sadd.s32 %s305, %s309
          %s311 = smul.addr %s310, 64
          %s312 = scalar_lea.hbm %s3, %s311
          %s314 = sshll.u32 %s301, 4
          %s315 = int_to_ptr.vmem [resolvable:$true] %s314
          %317 = dma.vmem_to_hbm [thread:$0]  %s315, 128, %s312, %s298
        $region40: #{tpu_custom_call.1} parent=31 // pred_fallthru
          _
      $region32: #{tpu_custom_call.1} parent=5 // pred_fallthru
        _
      %p318 = scmp.le.s32.totalorder 2, %s15
      // Predicated region
      $region41: #{tpu_custom_call.1} parent=5 // pred_check
        %p319 = pneg %p318
      $region42: #{tpu_custom_call.1} parent=5 // pred_check_branch
        %321 = sbr.rel (%p319) target = $region44
      $region43: #{tpu_custom_call.1} parent=5 // pred_region
        %s322 = ssub.s32 %s15, 2
        // Predicated region
        $region45: #{tpu_custom_call.1} parent=43 // pred_check
          %p323 = pneg %p128
        $region46: #{tpu_custom_call.1} parent=43 // pred_check_branch
          %325 = sbr.rel (%p323) target = $region48
        $region47: #{tpu_custom_call.1} parent=43 // pred_region
          %s326 = sand.u32 %s113, 1
          %s327 = scalar_lea.sflag [#allocation4], %s326
          %s328 = sand.u32 %s113, 1
          %s329 = smul.addr %s328, 8
          %s330 = scalar_lea.vmem [#allocation5], %s329
          %331 = dma.done %s327, 128
        $region48: #{tpu_custom_call.1} parent=43 // pred_fallthru
          _
      $region44: #{tpu_custom_call.1} parent=5 // pred_fallthru
        _
    $region6: #{tpu_custom_call.1} parent=1 // loop_footer
      %s19 = sadd.s32 1, %s15
    $region7: #{tpu_custom_call.1} parent=1 // loop_footer_branch
      %14 = sbr.rel target = $region3
    $region8: #{tpu_custom_call.1} parent=1 // loop_exit
      _
    %332 = vsyncpa [#allocation3], 1
    %s333 = scalar_lea.sflag [#allocation3], 1
    %334 = vsyncpa %s333, 1
    %335 = vsyncpa [#allocation4], 1
    %s336 = scalar_lea.sflag [#allocation4], 1
    %337 = vsyncpa %s336, 1

</llo_original>
